<compile_context>
chip_gen: v6e
topology: v6e:2x2x1
jax: 0.10.0
libtpu: 0.0.40
codegen_flags: <defaults>
</compile_context>

<pallas_src>
import functools

import jax
import jax.numpy as jnp
from jax.experimental import pallas as pl
from jax.experimental.pallas import tpu as pltpu


_LANE = 128
_SUBLANE = 8
# Explicit scoped-VMEM request: above v5e's 16 MiB default, comfortably under
# v7x's 64 MiB physical per-TC VMEM.
_VMEM_LIMIT_BYTES = 40 * 1024 * 1024
# Budget for the kernel's own tiles (headroom left under the limit for
# compiler-internal scratch).
_TILE_BUDGET_BYTES = 32 * 1024 * 1024


def _round_up(x, m):
    return ((x + m - 1) // m) * m


def _cdiv(a, b):
    return (a + b - 1) // b


# --------------------------------------------------------------------------- #
# Kernels
# --------------------------------------------------------------------------- #
def _linear_kernel(x_ref, w_ref, b_ref, o_ref):
    """Full-K path: one MXU matmul per batch tile, bias add in f32, store."""
    acc = jnp.dot(x_ref[...], w_ref[...], preferred_element_type=jnp.float32)
    o_ref[...] = (acc + b_ref[...]).astype(o_ref.dtype)


def _linear_kernel_ktiled(x_ref, w_ref, b_ref, o_ref, acc_ref):
    """K-tiled path: accumulate partial products in an f32 VMEM scratch."""
    k = pl.program_id(1)

    @pl.when(k == 0)
    def _():
        acc_ref[...] = jnp.zeros_like(acc_ref)

    acc_ref[...] += jnp.dot(x_ref[...], w_ref[...],
                            preferred_element_type=jnp.float32)

    @pl.when(k == pl.num_programs(1) - 1)
    def _():
        o_ref[...] = (acc_ref[...] + b_ref[...]).astype(o_ref.dtype)


# --------------------------------------------------------------------------- #
# Wrapper
# --------------------------------------------------------------------------- #
def prepare_linear_params(weight, bias):
    """One-time parameter prep (hoisted out of the per-forward path).

    weight: (num_classes, input_size)  -- PyTorch nn.Linear layout.
    bias:   (num_classes,)
    Returns (w_kn, b_row): weight zero-padded to a lane-dense class dim NP
    (multiple of 128) and pre-transposed to (input_size, NP); bias as (1, NP).
    """
    num_classes, _ = weight.shape
    NP = _round_up(num_classes, _LANE)
    w_kn = jnp.transpose(jnp.pad(weight, ((0, NP - num_classes), (0, 0))))  # (K, NP)
    b_row = jnp.pad(bias, (0, NP - num_classes)).reshape(1, NP)
    return w_kn, b_row


def logistic_regression_forward(x, w_kn, b_row, num_classes, *, return_padded=False):
    """out = x @ weight.T + bias  (nn.Linear forward, raw logits).

    x:     (B, input_size)
    w_kn:  (input_size, NP)   from prepare_linear_params
    b_row: (1, NP)            from prepare_linear_params
    """
    B, K = x.shape
    Kw, NP = w_kn.shape
    assert K == Kw, (K, Kw)
    out_dtype = x.dtype

    xb = jnp.dtype(x.dtype).itemsize
    wb = jnp.dtype(w_kn.dtype).itemsize
    ob = jnp.dtype(out_dtype).itemsize

    # VMEM budget: double-buffered x and out tiles + (conservatively) double-buffered
    # resident weight + tiny bias.
    per_row = 2 * K * xb + 2 * NP * ob
    fixed = 2 * K * NP * wb + 2 * NP * 4
    tm_budget = (_TILE_BUDGET_BYTES - fixed) // per_row
    tm_budget = (tm_budget // _SUBLANE) * _SUBLANE

    if tm_budget >= _SUBLANE:
        # ------------------------- full-K path (common case) -------------------------
        tm = max(_SUBLANE, min(tm_budget, 2048, _round_up(B, _SUBLANE)))
        # On large batches keep >= ~8 grid steps so the megacore ("parallel") split
        # still leaves each TensorCore several iterations to pipeline.
        eight_step_tm = _round_up(_cdiv(B, 8), _SUBLANE)
        if eight_step_tm >= 256:
            tm = min(tm, eight_step_tm)

        grid_m = _cdiv(B, tm)
        cost = pl.CostEstimate(
            flops=2 * B * K * NP,
            transcendentals=0,
            bytes_accessed=B * K * xb + K * NP * wb + NP * 4 + B * NP * ob,
        )
        out = pl.pallas_call(
            _linear_kernel,
            out_shape=jax.ShapeDtypeStruct((B, NP), out_dtype),
            grid_spec=pltpu.PrefetchScalarGridSpec(
                num_scalar_prefetch=0,
                grid=(grid_m,),
                in_specs=[
                    pl.BlockSpec((tm, K), lambda i: (i, 0)),   # x tile (pipelined)
                    pl.BlockSpec((K, NP), lambda i: (0, 0)),   # weight (resident)
                    pl.BlockSpec((1, NP), lambda i: (0, 0)),   # bias (resident)
                ],
                out_specs=pl.BlockSpec((tm, NP), lambda i: (i, 0)),
            ),
            compiler_params=pltpu.CompilerParams(
                dimension_semantics=("parallel",),
                vmem_limit_bytes=_VMEM_LIMIT_BYTES,
            ),
            cost_estimate=cost,
        )(x, w_kn, b_row)
    else:
        # ---------- K-tiled fallback (very large input_size; rare for this module) ----
        tm = 512 if B >= 512 else max(_SUBLANE, _round_up(B, _SUBLANE))
        out_acc_bytes = 2 * tm * NP * ob + tm * NP * 4 + 2 * NP * 4
        tk = (_TILE_BUDGET_BYTES - out_acc_bytes) // (2 * tm * xb + 2 * NP * wb)
        tk = max(_LANE, (tk // _LANE) * _LANE)
        K_pad = _round_up(K, tk)
        # Zero-pad K so every (tm, tk) block is fully defined (the ragged last K block
        # would otherwise read uninitialized VMEM into the accumulation).
        # TODO(synk): for truly huge inputs this copies x once; a masked ragged K block
        # would avoid it.
        x_p = jnp.pad(x, ((0, 0), (0, K_pad - K))) if K_pad != K else x
        w_p = jnp.pad(w_kn, ((0, K_pad - K), (0, 0))) if K_pad != K else w_kn

        cost = pl.CostEstimate(
            flops=2 * B * K_pad * NP,
            transcendentals=0,
            bytes_accessed=B * K_pad * xb + K_pad * NP * wb + NP * 4 + B * NP * ob,
        )
        out = pl.pallas_call(
            _linear_kernel_ktiled,
            out_shape=jax.ShapeDtypeStruct((B, NP), out_dtype),
            grid_spec=pltpu.PrefetchScalarGridSpec(
                num_scalar_prefetch=0,
                grid=(_cdiv(B, tm), K_pad // tk),
                in_specs=[
                    pl.BlockSpec((tm, tk), lambda i, k: (i, k)),
                    pl.BlockSpec((tk, NP), lambda i, k: (k, 0)),
                    pl.BlockSpec((1, NP), lambda i, k: (0, 0)),
                ],
                out_specs=pl.BlockSpec((tm, NP), lambda i, k: (i, 0)),
                scratch_shapes=[pltpu.VMEM((tm, NP), jnp.float32)],
            ),
            compiler_params=pltpu.CompilerParams(
                dimension_semantics=("parallel", "arbitrary"),
                vmem_limit_bytes=_VMEM_LIMIT_BYTES,
            ),
            cost_estimate=cost,
        )(x_p, w_p, b_row)

    if return_padded:
        return out                       # (B, NP): mask padded classes downstream
    return out[:, :num_classes]          # columns-only slice; rows are already exact


if __name__ == "__main__":
    # Small shapes consistent with the module: input_size=32, num_classes=8, batch=8.
    batch, input_size, num_classes = 8, 32, 8

    key = jax.random.PRNGKey(0)
    kx, kw, kb = jax.random.split(key, 3)

    x = jax.random.normal(kx, (batch, input_size), dtype=jnp.float32)
    # Deterministic synthetic parameters (PyTorch nn.Linear layout).
    weight = jax.random.normal(kw, (num_classes, input_size), dtype=jnp.float32) * 0.1
    bias = jax.random.normal(kb, (num_classes,), dtype=jnp.float32) * 0.1

    # One-time parameter prep (padding / transpose hoisted out of the forward).
    w_kn, b_row = prepare_linear_params(weight, bias)

    fwd = jax.jit(functools.partial(logistic_regression_forward,
                                    num_classes=num_classes))
    out = jax.block_until_ready(fwd(x, w_kn, b_row))

    # Reference check against plain JAX (same math as torch nn.Linear forward).
    ref = x @ weight.T + bias
    assert out.shape == (batch, num_classes)
    assert jnp.allclose(out, ref, atol=1e-5, rtol=1e-5)

    print("KERNEL_OK")
</pallas_src>

<mosaic_0001>
module attributes {stable_mosaic.version = 11 : i64} {
  func.func @_linear_kernel(%arg0: i32, %arg1: memref<8x32xf32, #tpu.memory_space<vmem>>, %arg2: memref<32x128xf32, #tpu.memory_space<vmem>>, %arg3: memref<1x128xf32, #tpu.memory_space<vmem>>, %arg4: memref<8x128xf32, #tpu.memory_space<vmem>>) attributes {dimension_semantics = [#tpu.dimension_semantics<parallel>], iteration_bounds = array<i64: 1>, scalar_prefetch = 0 : i64, scratch_operands = 0 : i64, tpu.core_type = #tpu.core_type<tc>, window_params = [{transform_indices = @transform_0, window_bounds = array<i64: 8, 32>}, {pipeline_mode = #tpu.pipeline_mode<synchronous>, transform_indices = @transform_1, window_bounds = array<i64: 32, 128>}, {pipeline_mode = #tpu.pipeline_mode<synchronous>, transform_indices = @transform_2, window_bounds = array<i64: 1, 128>}, {transform_indices = @transform_3, window_bounds = array<i64: 8, 128>}]} {
    %c0 = arith.constant 0 : index
    %c0_0 = arith.constant 0 : index
    %0 = vector.load %arg1[%c0, %c0_0] : memref<8x32xf32, #tpu.memory_space<vmem>>, vector<8x32xf32>
    %c0_1 = arith.constant 0 : index
    %c0_2 = arith.constant 0 : index
    %1 = vector.load %arg2[%c0_1, %c0_2] : memref<32x128xf32, #tpu.memory_space<vmem>>, vector<32x128xf32>
    %cst = arith.constant dense<0.000000e+00> : vector<8x128xf32>
    %2 = tpu.matmul %0, %1, %cst {dimension_numbers = #tpu.dot_dimension_numbers<[1], [0], [0], [1], [0, 0, 1, 1], [], []>} : vector<8x32xf32>, vector<32x128xf32>, vector<8x128xf32> -> vector<8x128xf32>
    %c0_3 = arith.constant 0 : index
    %c0_4 = arith.constant 0 : index
    %3 = vector.load %arg3[%c0_3, %c0_4] : memref<1x128xf32, #tpu.memory_space<vmem>>, vector<1x128xf32>
    %4 = vector.broadcast %3 : vector<1x128xf32> to vector<8x128xf32>
    %5 = arith.addf %2, %4 : vector<8x128xf32>
    %c0_5 = arith.constant 0 : index
    %c0_6 = arith.constant 0 : index
    %6 = vector.load %arg4[%c0_5, %c0_6] : memref<8x128xf32, #tpu.memory_space<vmem>>, vector<8x128xf32>
    tpu.vector_store %arg4[%c0_5, %c0_6], %5 {strides = array<i32>} : memref<8x128xf32, #tpu.memory_space<vmem>>, vector<8x128xf32>,
    return
  }
  func.func @transform_0(%arg0: i32) -> (i32, i32) {
    %c0_i32 = arith.constant 0 : i32
    %c0_i32_0 = arith.constant 0 : i32
    return %arg0, %c0_i32 : i32, i32
  }
  func.func @transform_1(%arg0: i32) -> (i32, i32) {
    %c0_i32 = arith.constant 0 : i32
    %c0_i32_0 = arith.constant 0 : i32
    %c0_i32_1 = arith.constant 0 : i32
    return %c0_i32, %c0_i32_0 : i32, i32
  }
  func.func @transform_2(%arg0: i32) -> (i32, i32) {
    %c0_i32 = arith.constant 0 : i32
    %c0_i32_0 = arith.constant 0 : i32
    %c0_i32_1 = arith.constant 0 : i32
    return %c0_i32, %c0_i32_0 : i32, i32
  }
  func.func @transform_3(%arg0: i32) -> (i32, i32) {
    %c0_i32 = arith.constant 0 : i32
    %c0_i32_0 = arith.constant 0 : i32
    return %arg0, %c0_i32 : i32, i32
  }
}

</mosaic_0001>

<llo_original>
// kernel: logistic_regression_forward.1
$region0: #{logistic_regression_forward.1}
  #allocation0 [shape = 'u32[]', space=smem, size = 0x4, offset = 0x4, fixed_abs, tag = 'smem constant byte address 0x4 - core index']
  #allocation1 [shape = 'u32[144,128]{1,0:T(1,128)}', space=vmem, size = 0x12000, scoped, tag = 'internal scratch']
  %s0 = inlined_call_operand.hbm [shape: f32[8,32], index: 0, kind: input, shape index: {}]
  %s1 = inlined_call_operand.hbm [shape: f32[32,128], index: 1, kind: input, shape index: {}]
  %s2 = inlined_call_operand.vmem [shape: f32[1,128], index: 2, kind: input, shape index: {}]
  %s3 = inlined_call_operand.hbm [shape: f32[8,128], index: 3, kind: output, shape index: {}]
  %s4 = sld [smem:[#allocation0]]
  $region30: #{logistic_regression_forward.1} parent=0
    _
  %s6 = ssub.s32 1, %s4
  %s7 = scalar_select 0, %s6, %s4
  $region1: #{logistic_regression_forward.1} parent=0
    #allocation2 [shape = 'u8[4096]{0}', space=vmem, size = 0x1000, scoped, tag = 'input window, operand 0, single buffered']
    #allocation3 [shape = 's32[1]{0}', space=sflag, size = 0x4, scoped, tag = 'scoped memory for logistic_regression_forward.1']
    #allocation4 [shape = 's32[1]{0}', space=sflag, size = 0x4, scoped, tag = 'scoped memory for logistic_regression_forward.1']
    #allocation5 [shape = 'u8[16384]{0}', space=vmem, size = 0x4000, scoped, tag = 'input window, operand 1, single buffered']
    #allocation6 [shape = 's32[1]{0}', space=sflag, size = 0x4, scoped, tag = 'scoped memory for logistic_regression_forward.1']
    #allocation7 [shape = 'u8[4096]{0}', space=vmem, size = 0x1000, scoped, tag = 'output window, operand 0, single buffered']
    %8 = vsyncpa [#allocation3], 0
    %9 = vsyncpa [#allocation6], 0
    %10 = vsyncpa [#allocation4], 0
    // Predicated region
    $region2: #{logistic_regression_forward.1} parent=1 // pred_check
      _
    $region3: #{logistic_regression_forward.1} parent=1 // pred_check_branch
      %12 = sbr.rel (0) target = $region5
    $region4: #{logistic_regression_forward.1} parent=1 // pred_region
      %s14 = ssub.s32 128, 128
      %15 = vsyncadd [#allocation3], %s14
      %s17 = sshll.u32 [#allocation2], 4
      %s18 = int_to_ptr.vmem [resolvable:$true] %s17
      %20 = dma.hbm_to_vmem [thread:$0]  %s0, 128, %s18, [#allocation3]
    $region5: #{logistic_regression_forward.1} parent=1 // pred_fallthru
      _
    // Predicated region
    $region6: #{logistic_regression_forward.1} parent=1 // pred_check
      _
    $region7: #{logistic_regression_forward.1} parent=1 // pred_check_branch
      %22 = sbr.rel (0) target = $region9
    $region8: #{logistic_regression_forward.1} parent=1 // pred_region
      %s24 = ssub.s32 512, 512
      %25 = vsyncadd [#allocation6], %s24
      %s26 = sshll.u32 [#allocation5], 4
      %s27 = int_to_ptr.vmem [resolvable:$true] %s26
      %32 = dma.hbm_to_vmem [thread:$0]  %s1, 512, %s27, [#allocation6], 128, 128, 8
    $region9: #{logistic_regression_forward.1} parent=1 // pred_fallthru
      _
    // Predicated region
    $region10: #{logistic_regression_forward.1} parent=1 // pred_check
      _
    $region11: #{logistic_regression_forward.1} parent=1 // pred_check_branch
      %34 = sbr.rel (0) target = $region13
    $region12: #{logistic_regression_forward.1} parent=1 // pred_region
      _
    $region13: #{logistic_regression_forward.1} parent=1 // pred_fallthru
      _
    // Predicated region
    $region14: #{logistic_regression_forward.1} parent=1 // pred_check
      _
    $region15: #{logistic_regression_forward.1} parent=1 // pred_check_branch
      %36 = sbr.rel (0) target = $region17
    $region16: #{logistic_regression_forward.1} parent=1 // pred_region
      %37 = dma.done [#allocation3], 128
    $region17: #{logistic_regression_forward.1} parent=1 // pred_fallthru
      _
    // Predicated region
    $region18: #{logistic_regression_forward.1} parent=1 // pred_check
      _
    $region19: #{logistic_regression_forward.1} parent=1 // pred_check_branch
      %39 = sbr.rel (0) target = $region21
    $region20: #{logistic_regression_forward.1} parent=1 // pred_region
      %40 = dma.done [#allocation6], 512
    $region21: #{logistic_regression_forward.1} parent=1 // pred_fallthru
      _
    %v41 = vld [vmem:[#allocation2] sm:$0xff]
    %v42 = vld [vmem:[#allocation5] sm:$0xff]
    %v43 = vld [vmem:[#allocation5 + $0x8] sm:$0xff]
    %v44 = vld [vmem:[#allocation5 + $0x10] sm:$0xff]
    %v45 = vld [vmem:[#allocation5 + $0x18] sm:$0xff]
    %v46 = vld [vmem:[%s2] sm:$0x1]
    %v48 = vlaneseq
    %v49 = vshrl.u32 %v48, 7
    %v50 = vsub.s32 0, %v49
    %v51 = vrot.slane %v46, %v50
    %vm53 = vcmask 261120
    %v55 = vsel %vm53, %v41, 0
    %57 = vmatprep.subr.mxu0 0.0
    %58 = vmatpush1.msra.mxu0 0.0
    %59 = vmatprep.subr.mxu0 0.0
    %60 = vmatpush1.msra.mxu0 0.0
    %61 = vmatprep.subr.mxu0 0.0
    %62 = vmatpush1.msra.mxu0 0.0
    %63 = vmatprep.subr.mxu0 0.0
    %64 = vmatpush1.msra.mxu0 0.0
    %65 = vmatprep.subr.mxu0 0.0
    %66 = vmatpush1.msra.mxu0 0.0
    %67 = vmatprep.subr.mxu0 0.0
    %68 = vmatpush1.msra.mxu0 0.0
    %69 = vmatprep.subr.mxu0 0.0
    %70 = vmatpush1.msra.mxu0 0.0
    %71 = vmatprep.subr.mxu0 0.0
    %72 = vmatpush1.msra.mxu0 0.0
    %73 = vmatprep.subr.mxu0 0.0
    %74 = vmatpush1.msra.mxu0 0.0
    %75 = vmatprep.subr.mxu0 0.0
    %76 = vmatpush1.msra.mxu0 0.0
    %77 = vmatprep.subr.mxu0 0.0
    %78 = vmatpush1.msra.mxu0 0.0
    %79 = vmatprep.subr.mxu0 0.0
    %80 = vmatpush1.msra.mxu0 0.0
    %81 = vmatprep.subr.mxu0 0.0
    %82 = vmatpush1.msra.mxu0 %v45
    %83 = vmatprep.subr.mxu0 0.0
    %84 = vmatpush1.msra.mxu0 %v44
    %85 = vmatprep.subr.mxu0 0.0
    %86 = vmatpush1.msra.mxu0 %v43
    %87 = vmatprep.subr.mxu0 0.0
    %88 = vmatpush1.msra.mxu0 %v42
    %89 = vmatprep.subr.mxu0 0.0
    %90 = vmatpush2.msra.mxu0 0.0
    %91 = vmatprep.subr.mxu0 0.0
    %92 = vmatpush2.msra.mxu0 0.0
    %93 = vmatprep.subr.mxu0 0.0
    %94 = vmatpush2.msra.mxu0 0.0
    %95 = vmatprep.subr.mxu0 0.0
    %96 = vmatpush2.msra.mxu0 0.0
    %97 = vmatprep.subr.mxu0 0.0
    %98 = vmatpush2.msra.mxu0 0.0
    %99 = vmatprep.subr.mxu0 0.0
    %100 = vmatpush2.msra.mxu0 0.0
    %101 = vmatprep.subr.mxu0 0.0
    %102 = vmatpush2.msra.mxu0 0.0
    %103 = vmatprep.subr.mxu0 0.0
    %104 = vmatpush2.msra.mxu0 0.0
    %105 = vmatprep.subr.mxu0 0.0
    %106 = vmatpush2.msra.mxu0 0.0
    %107 = vmatprep.subr.mxu0 0.0
    %108 = vmatpush2.msra.mxu0 0.0
    %109 = vmatprep.subr.mxu0 0.0
    %110 = vmatpush2.msra.mxu0 0.0
    %111 = vmatprep.subr.mxu0 0.0
    %112 = vmatpush2.msra.mxu0 0.0
    %113 = vmatprep.subr.mxu0 0.0
    %114 = vmatpush2.msra.mxu0 0.0
    %115 = vmatprep.subr.mxu0 0.0
    %116 = vmatpush2.msra.mxu0 0.0
    %117 = vmatprep.subr.mxu0 0.0
    %118 = vmatpush2.msra.mxu0 0.0
    %119 = vmatprep.subr.mxu0 0.0
    %120 = vmatpush2.msra.mxu0 0.0
    %121 = vmatprep.mubr.f32.mxu0 0.0
    %122 = vmatmul.mubr.f32.gmra.mxu0 %v55
    %v123 = vpop.f32.mrf.mxu0
    %v124 = vadd.f32 %v51, %v123
    %v125 = vpop.f32.mrf.mxu0
    %126 = vdwg.mxu0
    %127 = vst [vmem:[#allocation7] sm:$0xff] %v124
    // Predicated region
    $region22: #{logistic_regression_forward.1} parent=1 // pred_check
      _
    $region23: #{logistic_regression_forward.1} parent=1 // pred_check_branch
      %129 = sbr.rel (0) target = $region25
    $region24: #{logistic_regression_forward.1} parent=1 // pred_region
      %s131 = ssub.s32 128, 128
      %132 = vsyncadd [#allocation4], %s131
      %s134 = sshll.u32 [#allocation7], 4
      %s135 = int_to_ptr.vmem [resolvable:$true] %s134
      %137 = dma.vmem_to_hbm [thread:$0]  %s135, 128, %s3, [#allocation4]
    $region25: #{logistic_regression_forward.1} parent=1 // pred_fallthru
      _
    // Predicated region
    $region26: #{logistic_regression_forward.1} parent=1 // pred_check
      _
    $region27: #{logistic_regression_forward.1} parent=1 // pred_check_branch
      %139 = sbr.rel (0) target = $region29
    $region28: #{logistic_regression_forward.1} parent=1 // pred_region
      %140 = dma.done [#allocation4], 128
    $region29: #{logistic_regression_forward.1} parent=1 // pred_fallthru
      _
    %141 = vsyncpa [#allocation3], 1
    %142 = vsyncpa [#allocation6], 1
    %143 = vsyncpa [#allocation4], 1

</llo_original>
